<compile_context>
chip_gen: v5e
topology: v5e:2x2
jax: 0.10.0
libtpu: 0.0.40
codegen_flags: <defaults>
</compile_context>

<pallas_src>
import functools
import math

import jax
import jax.numpy as jnp
from jax import lax
from jax.experimental import pallas as pl
from jax.experimental.pallas import tpu as pltpu


def _round_up(x, m):
    return ((x + m - 1) // m) * m


# --------------------------------------------------------------------------
# Kernel 1: fused K/V projection   y[p] = x[p] @ W[p] + b[p],  p in {k, v}
# --------------------------------------------------------------------------
def _kv_proj_kernel(x_ref, w_ref, b_ref, o_ref):
    # x: (1, tm, H)   w: (1, H, H) already (in, out)   b: (1, 1, H)
    x = x_ref[0]
    w = w_ref[0]
    b = b_ref[0].astype(jnp.float32)
    y = jnp.dot(x, w, preferred_element_type=jnp.float32) + b
    o_ref[0] = y.astype(o_ref.dtype)


def _kv_projection(x2, w2, b2, tm):
    n_proj, r_pad, h = x2.shape
    grid = (n_proj, r_pad // tm)
    return pl.pallas_call(
        _kv_proj_kernel,
        out_shape=jax.ShapeDtypeStruct((n_proj, r_pad, h), x2.dtype),
        grid_spec=pltpu.PrefetchScalarGridSpec(
            num_scalar_prefetch=0,
            grid=grid,
            in_specs=[
                pl.BlockSpec((1, tm, h), lambda p, m: (p, m, 0)),
                pl.BlockSpec((1, h, h), lambda p, m: (p, 0, 0)),
                pl.BlockSpec((1, 1, h), lambda p, m: (p, 0, 0)),
            ],
            out_specs=pl.BlockSpec((1, tm, h), lambda p, m: (p, m, 0)),
        ),
        compiler_params=pltpu.CompilerParams(
            dimension_semantics=("parallel", "parallel"),
            vmem_limit_bytes=48 * 1024 * 1024,
        ),
    )(x2, w2, b2)


# --------------------------------------------------------------------------
# Kernel 2: flash attention (online softmax) with fused, pre-scaled Q proj
# --------------------------------------------------------------------------
def _flash_attn_kernel(qx_ref, wq_ref, bq_ref, k_ref, v_ref, o_ref,
                       q_sc, m_sc, l_sc, acc_sc, *, tk, s_true, mask_keys):
    ki = pl.program_id(2)

    @pl.when(ki == 0)
    def _():
        # Project (pre-scaled) Q once per (batch, q-tile); resident in VMEM.
        q = jnp.dot(qx_ref[0], wq_ref[...], preferred_element_type=jnp.float32)
        q = q + bq_ref[...].astype(jnp.float32)
        q_sc[...] = q.astype(q_sc.dtype)
        m_sc[...] = jnp.full(m_sc.shape, -jnp.inf, m_sc.dtype)
        l_sc[...] = jnp.zeros(l_sc.shape, l_sc.dtype)
        acc_sc[...] = jnp.zeros(acc_sc.shape, acc_sc.dtype)

    k = k_ref[0]                                   # (tk, H)
    v = v_ref[0]                                   # (tk, H)

    s = jnp.dot(q_sc[...], k.T, preferred_element_type=jnp.float32)  # (tq, tk)
    if mask_keys:  # static: only emitted when the sequence was padded
        kid = ki * tk + lax.broadcasted_iota(jnp.int32, s.shape, 1)
        s = jnp.where(kid < s_true, s, -jnp.inf)

    m_prev = m_sc[...]
    m_new = jnp.maximum(m_prev, jnp.max(s, axis=-1, keepdims=True))
    alpha = jnp.exp(m_prev - m_new)
    p = jnp.exp(s - m_new)
    l_sc[...] = alpha * l_sc[...] + jnp.sum(p, axis=-1, keepdims=True)
    acc_sc[...] = alpha * acc_sc[...] + jnp.dot(
        p.astype(v.dtype), v, preferred_element_type=jnp.float32)
    m_sc[...] = m_new

    @pl.when(ki == pl.num_programs(2) - 1)
    def _():
        inv_l = pl.reciprocal(l_sc[...], approx=True)            # EUP slot
        o_ref[0] = (acc_sc[...] * inv_l).astype(o_ref.dtype)


# --------------------------------------------------------------------------
# Wrapper
# --------------------------------------------------------------------------
def attention_pallas(query, key, value, params, *, seq_tile=256, row_tile=512):
    """query/key/value: [B, S, H]; params: PyTorch-layout Linear weights."""
    B, S, H = query.shape
    assert key.shape == (B, S, H) and value.shape == (B, S, H)
    dtype = query.dtype

    # ---- sequence tiling (second-minor dims must be multiples of 8) ----
    t = min(_round_up(S, 8), seq_tile)
    s_pad = _round_up(S, t)
    mask_keys = s_pad != S
    if mask_keys:
        pad = ((0, 0), (0, s_pad - S), (0, 0))
        query_p, key_p, value_p = (jnp.pad(a, pad) for a in (query, key, value))
    else:
        query_p, key_p, value_p = query, key, value

    # ---- host-side weight prep: transpose to (in,out), fold softmax scale ----
    scale = 1.0 / math.sqrt(H)
    wq = (params["wq"].T * scale).astype(dtype)                     # (H, H)
    bq = (params["bq"] * scale).reshape(1, H).astype(dtype)         # (1, H)
    w2 = jnp.stack([params["wk"].T, params["wv"].T]).astype(dtype)  # (2, H, H)
    b2 = jnp.stack([params["bk"], params["bv"]]).reshape(2, 1, H).astype(dtype)

    # ---- fused, batch-packed K/V projection ----
    x2 = jnp.stack([key_p, value_p]).reshape(2, B * s_pad, H)
    rows = B * s_pad
    tm = min(rows, row_tile)
    rows_pad = _round_up(rows, tm)
    if rows_pad != rows:
        x2 = jnp.pad(x2, ((0, 0), (0, rows_pad - rows), (0, 0)))
    kv = _kv_projection(x2, w2, b2, tm)
    kv = kv[:, :rows].reshape(2, B, s_pad, H)
    K, V = kv[0], kv[1]

    # ---- flash attention with in-kernel Q projection ----
    q_spec = pl.BlockSpec((1, t, H), lambda b, qi, ki: (b, qi, 0))
    kv_spec = pl.BlockSpec((1, t, H), lambda b, qi, ki: (b, ki, 0))
    wq_spec = pl.BlockSpec((H, H), lambda b, qi, ki: (0, 0))   # resident weight
    bq_spec = pl.BlockSpec((1, H), lambda b, qi, ki: (0, 0))
    kernel = functools.partial(_flash_attn_kernel, tk=t, s_true=S,
                               mask_keys=mask_keys)
    out = pl.pallas_call(
        kernel,
        out_shape=jax.ShapeDtypeStruct((B, s_pad, H), dtype),
        grid_spec=pltpu.PrefetchScalarGridSpec(
            num_scalar_prefetch=0,
            grid=(B, s_pad // t, s_pad // t),
            in_specs=[q_spec, wq_spec, bq_spec, kv_spec, kv_spec],
            out_specs=q_spec,
            scratch_shapes=[
                pltpu.VMEM((t, H), dtype),         # projected, scaled Q tile
                pltpu.VMEM((t, 1), jnp.float32),   # running max
                pltpu.VMEM((t, 1), jnp.float32),   # running denom
                pltpu.VMEM((t, H), jnp.float32),   # output accumulator
            ],
        ),
        compiler_params=pltpu.CompilerParams(
            dimension_semantics=("parallel", "parallel", "arbitrary"),
            vmem_limit_bytes=48 * 1024 * 1024,
        ),
    )(query_p, wq, bq, K, V)
    return out[:, :S] if mask_keys else out


# --------------------------------------------------------------------------
# Pure-JAX reference mirroring the PyTorch module
# --------------------------------------------------------------------------
def attention_ref(query, key, value, params):
    def linear(x, w, b):
        return jnp.einsum("bsh,oh->bso", x, w) + b
    Q = linear(query, params["wq"], params["bq"])
    K = linear(key, params["wk"], params["bk"])
    V = linear(value, params["wv"], params["bv"])
    scale = 1.0 / math.sqrt(Q.shape[-1])
    scores = jnp.einsum("bqh,bkh->bqk", Q, K) * scale
    probs = jax.nn.softmax(scores, axis=-1)
    return jnp.einsum("bqk,bkh->bqh", probs, V)


if __name__ == "__main__":
    B, S, H = 2, 8, 32  # batch, seq, hidden_dim

    key0 = jax.random.PRNGKey(0)
    k_q, k_k, k_v, k_wq, k_wk, k_wv, k_bq, k_bk, k_bv = jax.random.split(key0, 9)

    query = jax.random.normal(k_q, (B, S, H), dtype=jnp.float32)
    key_in = jax.random.normal(k_k, (B, S, H), dtype=jnp.float32)
    value = jax.random.normal(k_v, (B, S, H), dtype=jnp.float32)

    # PyTorch Linear layout: W [out, in], b [out].
    bound = 1.0 / math.sqrt(H)
    params = {
        "wq": jax.random.uniform(k_wq, (H, H), jnp.float32, -bound, bound),
        "wk": jax.random.uniform(k_wk, (H, H), jnp.float32, -bound, bound),
        "wv": jax.random.uniform(k_wv, (H, H), jnp.float32, -bound, bound),
        "bq": jax.random.uniform(k_bq, (H,), jnp.float32, -bound, bound),
        "bk": jax.random.uniform(k_bk, (H,), jnp.float32, -bound, bound),
        "bv": jax.random.uniform(k_bv, (H,), jnp.float32, -bound, bound),
    }

    out = attention_pallas(query, key_in, value, params)
    out = jax.block_until_ready(out)

    ref = attention_ref(query, key_in, value, params)
    assert out.shape == (B, S, H)
    # tolerance accounts for the EUP approx reciprocal in the final normalize
    assert jnp.allclose(out, ref, atol=2e-3, rtol=2e-3), "mismatch vs reference"

    print("KERNEL_OK")
</pallas_src>

<mosaic_0001>
module attributes {stable_mosaic.version = 11 : i64} {
  func.func @_kv_proj_kernel(%arg0: i32, %arg1: i32, %arg2: memref<1x16x32xf32, #tpu.memory_space<vmem>>, %arg3: memref<1x32x32xf32, #tpu.memory_space<vmem>>, %arg4: memref<1x1x32xf32, #tpu.memory_space<vmem>>, %arg5: memref<1x16x32xf32, #tpu.memory_space<vmem>>) attributes {dimension_semantics = [#tpu.dimension_semantics<parallel>, #tpu.dimension_semantics<parallel>], iteration_bounds = array<i64: 2, 1>, scalar_prefetch = 0 : i64, scratch_operands = 0 : i64, tpu.core_type = #tpu.core_type<tc>, window_params = [{transform_indices = @transform_0, window_bounds = array<i64: 1, 16, 32>}, {transform_indices = @transform_1, window_bounds = array<i64: 1, 32, 32>}, {transform_indices = @transform_2, window_bounds = array<i64: 1, 1, 32>}, {transform_indices = @transform_3, window_bounds = array<i64: 1, 16, 32>}]} {
    %c0 = arith.constant 0 : index
    %c0_0 = arith.constant 0 : index
    %c0_1 = arith.constant 0 : index
    %0 = vector.load %arg2[%c0, %c0_0, %c0_1] : memref<1x16x32xf32, #tpu.memory_space<vmem>>, vector<1x16x32xf32>
    %1 = vector.shape_cast %0 : vector<1x16x32xf32> to vector<16x32xf32>
    %c0_2 = arith.constant 0 : index
    %c0_3 = arith.constant 0 : index
    %c0_4 = arith.constant 0 : index
    %2 = vector.load %arg3[%c0_2, %c0_3, %c0_4] : memref<1x32x32xf32, #tpu.memory_space<vmem>>, vector<1x32x32xf32>
    %3 = vector.shape_cast %2 : vector<1x32x32xf32> to vector<32x32xf32>
    %c0_5 = arith.constant 0 : index
    %c0_6 = arith.constant 0 : index
    %c0_7 = arith.constant 0 : index
    %4 = vector.load %arg4[%c0_5, %c0_6, %c0_7] : memref<1x1x32xf32, #tpu.memory_space<vmem>>, vector<1x1x32xf32>
    %5 = vector.shape_cast %4 : vector<1x1x32xf32> to vector<1x32xf32>
    %cst = arith.constant dense<0.000000e+00> : vector<16x32xf32>
    %6 = tpu.matmul %1, %3, %cst {dimension_numbers = #tpu.dot_dimension_numbers<[1], [0], [0], [1], [0, 0, 1, 1], [], []>} : vector<16x32xf32>, vector<32x32xf32>, vector<16x32xf32> -> vector<16x32xf32>
    %7 = vector.broadcast %5 : vector<1x32xf32> to vector<16x32xf32>
    %8 = arith.addf %6, %7 : vector<16x32xf32>
    %c0_8 = arith.constant 0 : index
    %c0_9 = arith.constant 0 : index
    %c0_10 = arith.constant 0 : index
    %9 = vector.load %arg5[%c0_8, %c0_9, %c0_10] : memref<1x16x32xf32, #tpu.memory_space<vmem>>, vector<1x16x32xf32>
    %10 = vector.shape_cast %9 : vector<1x16x32xf32> to vector<16x32xf32>
    %11 = vector.shape_cast %8 : vector<16x32xf32> to vector<1x16x32xf32>
    tpu.vector_store %arg5[%c0_8, %c0_9, %c0_10], %11 {strides = array<i32>} : memref<1x16x32xf32, #tpu.memory_space<vmem>>, vector<1x16x32xf32>,
    return
  }
  func.func @transform_0(%arg0: i32, %arg1: i32) -> (i32, i32, i32) {
    %c0_i32 = arith.constant 0 : i32
    %c0_i32_0 = arith.constant 0 : i32
    return %arg0, %arg1, %c0_i32 : i32, i32, i32
  }
  func.func @transform_1(%arg0: i32, %arg1: i32) -> (i32, i32, i32) {
    %c0_i32 = arith.constant 0 : i32
    %c0_i32_0 = arith.constant 0 : i32
    %c0_i32_1 = arith.constant 0 : i32
    return %arg0, %c0_i32, %c0_i32_0 : i32, i32, i32
  }
  func.func @transform_2(%arg0: i32, %arg1: i32) -> (i32, i32, i32) {
    %c0_i32 = arith.constant 0 : i32
    %c0_i32_0 = arith.constant 0 : i32
    %c0_i32_1 = arith.constant 0 : i32
    return %arg0, %c0_i32, %c0_i32_0 : i32, i32, i32
  }
  func.func @transform_3(%arg0: i32, %arg1: i32) -> (i32, i32, i32) {
    %c0_i32 = arith.constant 0 : i32
    %c0_i32_0 = arith.constant 0 : i32
    return %arg0, %arg1, %c0_i32 : i32, i32, i32
  }
}

</mosaic_0001>

<llo_original>
// kernel: tpu_custom_call.1
$region0: #{tpu_custom_call.1}
  #allocation0 [shape = 'u32[]', space=smem, size = 0x4, offset = 0x4, fixed_abs, tag = 'smem constant byte address 0x4 - core index']
  #allocation1 [shape = 'u32[72,128]{1,0:T(1,128)}', space=vmem, size = 0x9000, scoped, tag = 'internal scratch']
  %s0 = inlined_call_operand.hbm [shape: f32[2,16,32], index: 0, kind: input, shape index: {}]
  %s1 = inlined_call_operand.hbm [shape: f32[2,32,32], index: 1, kind: input, shape index: {}]
  %s2 = inlined_call_operand.hbm [shape: f32[2,1,32], index: 2, kind: input, shape index: {}]
  %s3 = inlined_call_operand.hbm [shape: f32[2,16,32], index: 3, kind: output, shape index: {}]
  %s4 = sld [smem:[#allocation0]]
  $region57: #{tpu_custom_call.1} parent=0
    _
  %s6 = ssub.s32 1, %s4
  %s7 = scalar_select 0, %s6, %s4
  $region1: #{tpu_custom_call.1} parent=0
    #allocation2 [shape = 'u8[16384]{0}', space=vmem, size = 0x4000, scoped, tag = 'input window, operand 0']
    #allocation3 [shape = 's32[2]{0}', space=sflag, size = 0x8, scoped, tag = 'scoped memory for tpu_custom_call.1']
    #allocation4 [shape = 's32[2]{0}', space=sflag, size = 0x8, scoped, tag = 'scoped memory for tpu_custom_call.1']
    #allocation5 [shape = 'u8[32768]{0}', space=vmem, size = 0x8000, scoped, tag = 'input window, operand 1']
    #allocation6 [shape = 's32[2]{0}', space=sflag, size = 0x8, scoped, tag = 'scoped memory for tpu_custom_call.1']
    #allocation7 [shape = 'u8[1024]{0}', space=vmem, size = 0x400, scoped, tag = 'input window, operand 2']
    #allocation8 [shape = 'u8[16384]{0}', space=vmem, size = 0x4000, scoped, tag = 'output window, operand 0']
    %8 = vsyncpa [#allocation3], 0
    %s9 = scalar_lea.sflag [#allocation3], 1
    %10 = vsyncpa %s9, 0
    %11 = vsyncpa [#allocation6], 0
    %s12 = scalar_lea.sflag [#allocation6], 1
    %13 = vsyncpa %s12, 0
    %14 = vsyncpa [#allocation4], 0
    %s15 = scalar_lea.sflag [#allocation4], 1
    %16 = vsyncpa %s15, 0
    loop: start=0, step=1, limit=4
    $region2: #{tpu_custom_call.1} parent=1 // loop_pre_header
      _
    $region3: #{tpu_custom_call.1} parent=1 // loop_header
      %s18 = sphi 0, %s22
      %p19 = scmp.ge.s32.totalorder %s18, 4
      %s25 = sphi 0, %s37
      %s26 = sphi 0, %s33
      %s27 = sphi 0, %s25
      %s28 = sphi 0, %s26
      %s29 = sphi 0, %s27
      %s30 = sphi 0, %s28
      %s42 = sphi 0, %s44
      %s45 = sphi 0, %s42
      %s46 = sphi 0, %s45
      %s62 = sphi 0, %s46
      %s68 = sphi 0, %s70
      %s71 = sphi 0, %s68
      %s72 = sphi 0, %s71
      %s88 = sphi 0, %s72
      %s94 = sphi 0, %s96
      %s97 = sphi 0, %s94
      %s98 = sphi 0, %s97
      %s114 = sphi 0, %s98
      %s122 = sphi 0, %s124
      %s125 = sphi 0, %s122
      %s126 = sphi 0, %s125
      %s142 = sphi 0, %s126
    $region4: #{tpu_custom_call.1} parent=1 // loop_header_branch
      %21 = sbr.rel (%p19) target = $region8
    $region5: #{tpu_custom_call.1} parent=1 // loop_body
      %s23 = ssub.s32 %s18, 1
      %s24 = ssub.s32 %s18, 2
      %s31 = sadd.s32 1, %s26
      %p32 = scmp.ge.s32.totalorder %s31, 1
      %s33 = scalar_select %p32, 0, %s31
      %s34 = sadd.s32 1, %s25
      %s35 = scalar_select %p32, %s34, %s25
      %p36 = scmp.ge.s32.totalorder %s35, 2
      %s37 = scalar_select %p36, 0, %s35
      %s38 = ssub.s32 %s25, %s37
      %s39 = ssub.s32 %s26, %s33
      %s40 = sor.u32 %s38, %s39
      %p41 = scmp.eq.s32.totalorder %s40, 0
      %s43 = sadd.s32 %s42, 1
      %s44 = scalar_select %p41, %s42, %s43
      %p47 = pneg %p41
      %p48 = scmp.eq.s32.totalorder %s18, 1
      %p49 = por %p47, %p48
      %p50 = scmp.ne.s32.totalorder %s42, %s45
      %p51 = scmp.eq.s32.totalorder %s18, 0
      %p52 = por %p50, %p51
      %p53 = scmp.ne.s32.totalorder %s42, %s45
      %p54 = scmp.eq.s32.totalorder %s23, 1
      %p55 = por %p53, %p54
      %p56 = scmp.ne.s32.totalorder %s45, %s46
      %p57 = scmp.eq.s32.totalorder %s23, 0
      %p58 = por %p56, %p57
      %p59 = scmp.ne.s32.totalorder %s45, %s46
      %p60 = scmp.eq.s32.totalorder %s24, 1
      %p61 = por %p59, %p60
      %p63 = scmp.ne.s32.totalorder %s46, %s62
      %p64 = scmp.eq.s32.totalorder %s24, 0
      %p65 = por %p63, %p64
      %s66 = ssub.s32 %s25, %s37
      %p67 = scmp.eq.s32.totalorder %s66, 0
      %s69 = sadd.s32 %s68, 1
      %s70 = scalar_select %p67, %s68, %s69
      %p73 = pneg %p67
      %p74 = scmp.eq.s32.totalorder %s18, 1
      %p75 = por %p73, %p74
      %p76 = scmp.ne.s32.totalorder %s68, %s71
      %p77 = scmp.eq.s32.totalorder %s18, 0
      %p78 = por %p76, %p77
      %p79 = scmp.ne.s32.totalorder %s68, %s71
      %p80 = scmp.eq.s32.totalorder %s23, 1
      %p81 = por %p79, %p80
      %p82 = scmp.ne.s32.totalorder %s71, %s72
      %p83 = scmp.eq.s32.totalorder %s23, 0
      %p84 = por %p82, %p83
      %p85 = scmp.ne.s32.totalorder %s71, %s72
      %p86 = scmp.eq.s32.totalorder %s24, 1
      %p87 = por %p85, %p86
      %p89 = scmp.ne.s32.totalorder %s72, %s88
      %p90 = scmp.eq.s32.totalorder %s24, 0
      %p91 = por %p89, %p90
      %s92 = ssub.s32 %s25, %s37
      %p93 = scmp.eq.s32.totalorder %s92, 0
      %s95 = sadd.s32 %s94, 1
      %s96 = scalar_select %p93, %s94, %s95
      %p99 = pneg %p93
      %p100 = scmp.eq.s32.totalorder %s18, 1
      %p101 = por %p99, %p100
      %p102 = scmp.ne.s32.totalorder %s94, %s97
      %p103 = scmp.eq.s32.totalorder %s18, 0
      %p104 = por %p102, %p103
      %p105 = scmp.ne.s32.totalorder %s94, %s97
      %p106 = scmp.eq.s32.totalorder %s23, 1
      %p107 = por %p105, %p106
      %p108 = scmp.ne.s32.totalorder %s97, %s98
      %p109 = scmp.eq.s32.totalorder %s23, 0
      %p110 = por %p108, %p109
      %p111 = scmp.ne.s32.totalorder %s97, %s98
      %p112 = scmp.eq.s32.totalorder %s24, 1
      %p113 = por %p111, %p112
      %p115 = scmp.ne.s32.totalorder %s98, %s114
      %p116 = scmp.eq.s32.totalorder %s24, 0
      %p117 = por %p115, %p116
      %s118 = ssub.s32 %s25, %s37
      %s119 = ssub.s32 %s26, %s33
      %s120 = sor.u32 %s118, %s119
      %p121 = scmp.eq.s32.totalorder %s120, 0
      %s123 = sadd.s32 %s122, 1
      %s124 = scalar_select %p121, %s122, %s123
      %p127 = pneg %p121
      %p128 = scmp.eq.s32.totalorder %s18, 1
      %p129 = por %p127, %p128
      %p130 = scmp.ne.s32.totalorder %s122, %s125
      %p131 = scmp.eq.s32.totalorder %s18, 0
      %p132 = por %p130, %p131
      %p133 = scmp.ne.s32.totalorder %s122, %s125
      %p134 = scmp.eq.s32.totalorder %s23, 1
      %p135 = por %p133, %p134
      %p136 = scmp.ne.s32.totalorder %s125, %s126
      %p137 = scmp.eq.s32.totalorder %s23, 0
      %p138 = por %p136, %p137
      %p139 = scmp.ne.s32.totalorder %s125, %s126
      %p140 = scmp.eq.s32.totalorder %s24, 1
      %p141 = por %p139, %p140
      %p143 = scmp.ne.s32.totalorder %s126, %s142
      %p144 = scmp.eq.s32.totalorder %s24, 0
      %p145 = por %p143, %p144
      %p146 = scmp.le.s32.totalorder 1, %s18
      %p147 = scmp.lt.s32.totalorder %s18, 3
      %p148 = pnand %p146, %p147
      %p149 = pneg %p148
      // Predicated region
      $region9: #{tpu_custom_call.1} parent=5 // pred_check
        _
      $region10: #{tpu_custom_call.1} parent=5 // pred_check_branch
        %151 = sbr.rel (%p148) target = $region12
      $region11: #{tpu_custom_call.1} parent=5 // pred_region
        %s152 = ssub.s32 %s18, 1
      $region12: #{tpu_custom_call.1} parent=5 // pred_fallthru
        _
      %p153 = scmp.lt.s32.totalorder %s18, 2
      // Predicated region
      $region13: #{tpu_custom_call.1} parent=5 // pred_check
        %p154 = pneg %p153
      $region14: #{tpu_custom_call.1} parent=5 // pred_check_branch
        %156 = sbr.rel (%p154) target = $region16
      $region15: #{tpu_custom_call.1} parent=5 // pred_region
        // Predicated region
        $region17: #{tpu_custom_call.1} parent=15 // pred_check
          %p157 = pneg %p52
        $region18: #{tpu_custom_call.1} parent=15 // pred_check_branch
          %159 = sbr.rel (%p157) target = $region20
        $region19: #{tpu_custom_call.1} parent=15 // pred_region
          %s160 = sand.u32 %s42, 1
          %s161 = scalar_lea.sflag [#allocation3], %s160
          %s162 = sand.u32 %s42, 1
          %s163 = smul.addr %s162, 16
          %s164 = scalar_lea.vmem [#allocation2], %s163
          %s165 = smul.u32 2, %s26
          %167 = vsyncadd %s161, 0
          %s168 = smul.addr %s25, 2
          %s169 = sadd.s32 %s165, %s168
          %s170 = smul.addr %s169, 8
          %s171 = scalar_lea.hbm %s0, %s170
          %s172 = sshll.u32 %s171, 4
          %s173 = int_to_ptr.hbm [resolvable:$true] %s172
          %s174 = sshll.u32 %s164, 4
          %s175 = int_to_ptr.vmem [resolvable:$true] %s174
          %180 = dma.hbm_to_vmem [thread:$0]  %s173, 256, %s175, %s161, 128, 128, 8
        $region20: #{tpu_custom_call.1} parent=15 // pred_fallthru
          _
        // Predicated region
        $region21: #{tpu_custom_call.1} parent=15 // pred_check
          %p181 = pneg %p78
        $region22: #{tpu_custom_call.1} parent=15 // pred_check_branch
          %183 = sbr.rel (%p181) target = $region24
        $region23: #{tpu_custom_call.1} parent=15 // pred_region
          %s184 = sand.u32 %s18, 1
          %s185 = scalar_lea.sflag [#allocation6], %s184
          %s186 = sand.u32 %s68, 1
          %s187 = smul.addr %s186, 32
          %s188 = scalar_lea.vmem [#allocation5], %s187
          %190 = vsyncadd %s185, 0
          %s191 = smul.addr %s25, 4
          %s192 = smul.addr %s191, 8
          %s193 = scalar_lea.hbm %s1, %s192
          %s194 = sshll.u32 %s193, 4
          %s195 = int_to_ptr.hbm [resolvable:$true] %s194
          %s196 = sshll.u32 %s188, 4
          %s197 = int_to_ptr.vmem [resolvable:$true] %s196
          %202 = dma.hbm_to_vmem [thread:$0]  %s195, 512, %s197, %s185, 128, 128, 8
        $region24: #{tpu_custom_call.1} parent=15 // pred_fallthru
          _
        // Predicated region
        $region25: #{tpu_custom_call.1} parent=15 // pred_check
          %p203 = pneg %p104
        $region26: #{tpu_custom_call.1} parent=15 // pred_check_branch
          %205 = sbr.rel (%p203) target = $region28
        $region27: #{tpu_custom_call.1} parent=15 // pred_region
          %s206 = sand.u32 %s18, 1
          %s207 = scalar_lea.sflag [#allocation6], %s206
          %s208 = sand.u32 %s94, 1
          %s209 = scalar_lea.vmem [#allocation7], %s208
          %211 = vsyncadd %s207, 0
          %s212 = scalar_lea.hbm %s2, %s25
          %s214 = sshll.u32 %s212, 4
          %s215 = int_to_ptr.hbm [resolvable:$true] %s214
          %s216 = sshll.u32 %s209, 4
          %s217 = int_to_ptr.vmem [resolvable:$true] %s216
          %219 = dma.hbm_to_vmem [thread:$0]  %s215, 16, %s217, %s207
        $region28: #{tpu_custom_call.1} parent=15 // pred_fallthru
          _
      $region16: #{tpu_custom_call.1} parent=5 // pred_fallthru
        _
      %p220 = scmp.le.s32.totalorder 1, %s18
      %p221 = scmp.lt.s32.totalorder %s18, 3
      %p222 = pnand %p220, %p221
      %p223 = pneg %p222
      // Predicated region
      $region29: #{tpu_custom_call.1} parent=5 // pred_check
        _
      $region30: #{tpu_custom_call.1} parent=5 // pred_check_branch
        %225 = sbr.rel (%p222) target = $region32
      $region31: #{tpu_custom_call.1} parent=5 // pred_region
        %s226 = ssub.s32 %s18, 1
        %s227 = sand.u32 %s45, 1
        %s228 = scalar_lea.sflag [#allocation3], %s227
        %s229 = sand.u32 %s45, 1
        %s230 = smul.addr %s229, 16
        %s231 = scalar_lea.vmem [#allocation2], %s230
        // Predicated region
        $region33: #{tpu_custom_call.1} parent=31 // pred_check
          %p232 = pneg %p58
        $region34: #{tpu_custom_call.1} parent=31 // pred_check_branch
          %234 = sbr.rel (%p232) target = $region36
        $region35: #{tpu_custom_call.1} parent=31 // pred_region
          %236 = dma.done %s228, 256
        $region36: #{tpu_custom_call.1} parent=31 // pred_fallthru
          _
        %s237 = sand.u32 %s23, 1
        %s238 = scalar_lea.sflag [#allocation6], %s237
        %s239 = sand.u32 %s71, 1
        %s240 = smul.addr %s239, 32
        %s241 = scalar_lea.vmem [#allocation5], %s240
        // Predicated region
        $region37: #{tpu_custom_call.1} parent=31 // pred_check
          %p242 = pneg %p84
        $region38: #{tpu_custom_call.1} parent=31 // pred_check_branch
          %244 = sbr.rel (%p242) target = $region40
        $region39: #{tpu_custom_call.1} parent=31 // pred_region
          %246 = dma.done %s238, 512
        $region40: #{tpu_custom_call.1} parent=31 // pred_fallthru
          _
        %s247 = sand.u32 %s23, 1
        %s248 = scalar_lea.sflag [#allocation6], %s247
        %s249 = sand.u32 %s97, 1
        %s250 = scalar_lea.vmem [#allocation7], %s249
        // Predicated region
        $region41: #{tpu_custom_call.1} parent=31 // pred_check
          %p251 = pneg %p110
        $region42: #{tpu_custom_call.1} parent=31 // pred_check_branch
          %253 = sbr.rel (%p251) target = $region44
        $region43: #{tpu_custom_call.1} parent=31 // pred_region
          %255 = dma.done %s248, 16
        $region44: #{tpu_custom_call.1} parent=31 // pred_fallthru
          _
        %s256 = sand.u32 %s45, 1
        %s257 = scalar_lea.sflag [#allocation3], %s256
        %s258 = sand.u32 %s45, 1
        %s259 = smul.addr %s258, 16
        %s260 = scalar_lea.vmem [#allocation2], %s259
        %p261 = pneg %p58
        %p262 = pneg %p55
        %s263 = sand.u32 %s23, 1
        %s264 = scalar_lea.sflag [#allocation6], %s263
        %s265 = sand.u32 %s71, 1
        %s266 = smul.addr %s265, 32
        %s267 = scalar_lea.vmem [#allocation5], %s266
        %p268 = pneg %p84
        %p269 = pneg %p81
        %s270 = sand.u32 %s23, 1
        %s271 = scalar_lea.sflag [#allocation6], %s270
        %s272 = sand.u32 %s97, 1
        %s273 = scalar_lea.vmem [#allocation7], %s272
        %p274 = pneg %p110
        %p275 = pneg %p107
        %p276 = pneg %p138
        %p277 = pneg %p135
        %s278 = sand.u32 %s125, 1
        %s279 = scalar_lea.sflag [#allocation4], %s278
        %s280 = sand.u32 %s125, 1
        %s281 = smul.addr %s280, 16
        %s282 = scalar_lea.vmem [#allocation8], %s281
        %s283 = smul.u32 2, %s28
        %s284 = smul.u32 2, %s28
        %v285 = vld [vmem:[%s231] sm:$0xff]
        %v286 = vld [vmem:[%s231 + $0x8] sm:$0xff]
        %v287 = vld [vmem:[%s241] sm:$0xff]
        %v288 = vld [vmem:[%s241 + $0x8] sm:$0xff]
        %v289 = vld [vmem:[%s241 + $0x10] sm:$0xff]
        %v290 = vld [vmem:[%s241 + $0x18] sm:$0xff]
        %v291 = vld [vmem:[%s250] sm:$0x1]
        %v293 = vperm.slane %v291, 0
        %vm295 = vcmask 261120
        %v297 = vsel %vm295, %v285, 0
        %v300 = vsel %vm295, %v286, 0
        %302 = vmatpush.msra.mxu0 0.0
        %303 = vmatpush.msra.mxu0 0.0
        %304 = vmatpush.msra.mxu0 0.0
        %305 = vmatpush.msra.mxu0 0.0
        %306 = vmatpush.msra.mxu0 0.0
        %307 = vmatpush.msra.mxu0 0.0
        %308 = vmatpush.msra.mxu0 0.0
        %309 = vmatpush.msra.mxu0 0.0
        %310 = vmatpush.msra.mxu0 0.0
        %311 = vmatpush.msra.mxu0 0.0
        %312 = vmatpush.msra.mxu0 0.0
        %313 = vmatpush.msra.mxu0 0.0
        %314 = vmatpush.msra.mxu0 %v290
        %315 = vmatpush.msra.mxu0 %v289
        %316 = vmatpush.msra.mxu0 %v288
        %317 = vmatpush.msra.mxu0 %v287
        %318 = vmatmul.f32.gmra.mxu0 %v297
        %v319 = vpop.f32.mrf.mxu0
        %v320 = vadd.f32 %v293, %v319
        %321 = vmatmul.f32.gmra.mxu0 %v300
        %v322 = vpop.f32.mrf.mxu0
        %v323 = vadd.f32 %v293, %v322
        %324 = vdwg.mxu0
        %325 = vst.msk [vmem:[%s282] sm:$0xff] %vm295, %v320
        %326 = vst.msk [vmem:[%s282 + $0x8] sm:$0xff] %vm295, %v323
        %s327 = sand.u32 %s125, 1
        %s328 = scalar_lea.sflag [#allocation4], %s327
        %s329 = sand.u32 %s125, 1
        %s330 = smul.addr %s329, 16
        %s331 = scalar_lea.vmem [#allocation8], %s330
        // Predicated region
        $region45: #{tpu_custom_call.1} parent=31 // pred_check
          %p332 = pneg %p135
        $region46: #{tpu_custom_call.1} parent=31 // pred_check_branch
          %334 = sbr.rel (%p332) target = $region48
        $region47: #{tpu_custom_call.1} parent=31 // pred_region
          %s335 = smul.u32 2, %s28
          %337 = vsyncadd %s328, 0
          %s338 = smul.addr %s27, 2
          %s339 = sadd.s32 %s335, %s338
          %s340 = smul.addr %s339, 8
          %s341 = scalar_lea.hbm %s3, %s340
          %s342 = sshll.u32 %s331, 4
          %s343 = int_to_ptr.vmem [resolvable:$true] %s342
          %s344 = sshll.u32 %s341, 4
          %s345 = int_to_ptr.hbm [resolvable:$true] %s344
          %350 = dma.vmem_to_hbm [thread:$0]  %s343, 256, %s345, %s328, 128, 128, 8
        $region48: #{tpu_custom_call.1} parent=31 // pred_fallthru
          _
      $region32: #{tpu_custom_call.1} parent=5 // pred_fallthru
        _
      %p351 = scmp.le.s32.totalorder 2, %s18
      // Predicated region
      $region49: #{tpu_custom_call.1} parent=5 // pred_check
        %p352 = pneg %p351
      $region50: #{tpu_custom_call.1} parent=5 // pred_check_branch
        %354 = sbr.rel (%p352) target = $region52
      $region51: #{tpu_custom_call.1} parent=5 // pred_region
        %s355 = ssub.s32 %s18, 2
        // Predicated region
        $region53: #{tpu_custom_call.1} parent=51 // pred_check
          %p356 = pneg %p141
        $region54: #{tpu_custom_call.1} parent=51 // pred_check_branch
          %358 = sbr.rel (%p356) target = $region56
        $region55: #{tpu_custom_call.1} parent=51 // pred_region
          %s359 = sand.u32 %s126, 1
          %s360 = scalar_lea.sflag [#allocation4], %s359
          %s361 = sand.u32 %s126, 1
          %s362 = smul.addr %s361, 16
          %s363 = scalar_lea.vmem [#allocation8], %s362
          %365 = dma.done %s360, 256
        $region56: #{tpu_custom_call.1} parent=51 // pred_fallthru
          _
      $region52: #{tpu_custom_call.1} parent=5 // pred_fallthru
        _
    $region6: #{tpu_custom_call.1} parent=1 // loop_footer
      %s22 = sadd.s32 1, %s18
    $region7: #{tpu_custom_call.1} parent=1 // loop_footer_branch
      %17 = sbr.rel target = $region3
    $region8: #{tpu_custom_call.1} parent=1 // loop_exit
      _
    %366 = vsyncpa [#allocation3], 1
    %s367 = scalar_lea.sflag [#allocation3], 1
    %368 = vsyncpa %s367, 1
    %369 = vsyncpa [#allocation6], 1
    %s370 = scalar_lea.sflag [#allocation6], 1
    %371 = vsyncpa %s370, 1
    %372 = vsyncpa [#allocation4], 1
    %s373 = scalar_lea.sflag [#allocation4], 1
    %374 = vsyncpa %s373, 1

</llo_original>
